<compile_context>
chip_gen: v7x
topology: tpu7x:2x2x1
jax: 0.10.0
libtpu: 0.0.40
codegen_flags: <defaults>
</compile_context>

<pallas_src>
import jax
import jax.numpy as jnp
from jax.experimental import pallas as pl
from jax.experimental.pallas import tpu as pltpu

# ----- module hyper-parameters (from __init__ defaults) ----------------------
KL_WEIGHT = 1.0
PIXEL_WEIGHT = 1.0          # stored but never applied in the reference forward
PERCEPTUAL_WEIGHT = 0.0     # see TODO above
LOGVAR_INIT = 0.0

GRAY_COEFFS = (65.738 / 256.0, 129.057 / 256.0, 25.064 / 256.0)


def _vmem_capacity_bytes():
    """Physical VMEM of the local chip generation (fallback: 64 MiB)."""
    try:
        info = pltpu.get_tpu_info()
        cap = getattr(info, "vmem_capacity_bytes", None)
        if cap:
            return int(cap)
    except Exception:
        pass
    return 64 * 1024 * 1024


def _make_loss_kernel(TH, W):
    """Grid = (batch, H-tiles).  Accumulates per-batch (16, W) row partials.

    Output block (1, 16, W) f32, resident across the H axis:
      rows 0..7  -> per-(sublane,lane) partial sums of |inputs - recon|
      rows 8..15 -> per-(sublane,lane) partial sums of |grad(rec) - grad(inp)|
    (the *10 and the exp(-logvar) scaling are applied in the wrapper.)
    """
    c0, c1, c2 = GRAY_COEFFS

    def gray(x):                         # (3, R, W) native dtype -> (R, W) f32
        xf = x.astype(jnp.float32)
        return xf[0] * c0 + xf[1] * c1 + xf[2] * c2

    def kernel(inp_ref, rec_ref, inp_bot_ref, rec_bot_ref, acc_ref, carry_ref):
        h = pl.program_id(1)
        nh = pl.num_programs(1)
        first = h == 0
        last = h == nh - 1

        inp_f = inp_ref[0].astype(jnp.float32)       # (3, TH, W)
        rec_f = rec_ref[0].astype(jnp.float32)

        # ---- L1 reconstruction: channel-sum (VALU) then 8-row partials ------
        d_rec = jnp.sum(jnp.abs(inp_f - rec_f), axis=0)          # (TH, W)

        # ---- gray maps for the GradLayer stencil -----------------------------
        g_inp = inp_f[0] * c0 + inp_f[1] * c1 + inp_f[2] * c2     # (TH, W)
        g_rec = rec_f[0] * c0 + rec_f[1] * c1 + rec_f[2] * c2

        zero_row = jnp.zeros((1, W), jnp.float32)
        # row just above this tile: carried from previous tile (0 at image top)
        prv_inp = jnp.where(first, zero_row, carry_ref[0])        # (1, W)
        prv_rec = jnp.where(first, zero_row, carry_ref[1])
        # row just below this tile: single row sliced from the bottom halo
        nxt_inp = jnp.where(last, zero_row, gray(inp_bot_ref[0, :, 0:1, :]))
        nxt_rec = jnp.where(last, zero_row, gray(rec_bot_ref[0, :, 0:1, :]))

        # ---- hoisted boundary masks (shared by both grad maps) --------------
        row_idx = jax.lax.broadcasted_iota(jnp.int32, (TH, W), 0)
        lane_idx = jax.lax.broadcasted_iota(jnp.int32, (TH, W), 1)
        is_row0 = row_idx == 0
        is_rowl = row_idx == TH - 1
        is_lane0 = lane_idx == 0
        is_lanel = lane_idx == W - 1

        def grad_mag(g, prev_row, next_row):
            # vertical stencil: out[i] = g[i+1] - g[i-1]  (conv2d padding=1)
            g_up = jnp.where(is_row0, prev_row, pltpu.roll(g, shift=1, axis=0))
            g_dn = jnp.where(is_rowl, next_row, pltpu.roll(g, shift=TH - 1, axis=0))
            # horizontal stencil: out[j] = g[j+1] - g[j-1]
            g_l = jnp.where(is_lane0, 0.0, pltpu.roll(g, shift=1, axis=1))
            g_r = jnp.where(is_lanel, 0.0, pltpu.roll(g, shift=W - 1, axis=1))
            x_v = g_dn - g_up
            x_h = g_r - g_l
            return jnp.sqrt(x_v * x_v + x_h * x_h + 1e-6)

        gm_inp = grad_mag(g_inp, prv_inp, nxt_inp)
        gm_rec = grad_mag(g_rec, prv_rec, nxt_rec)
        d_grad = jnp.abs(gm_rec - gm_inp)                         # (TH, W)

        # carry this tile's last gray rows for the next tile of the same image
        carry_ref[0] = g_inp[TH - 1:TH, :]
        carry_ref[1] = g_rec[TH - 1:TH, :]

        # ---- VALU-only reduction of (TH, W) -> (8, W) row partials ----------
        def row_partial(x):
            return jnp.sum(x.reshape(TH // 8, 8, W), axis=0)

        p_rec = row_partial(d_rec)                                # (8, W)
        p_grad = row_partial(d_grad)

        @pl.when(first)
        def _init():
            acc_ref[0, 0:8, :] = p_rec
            acc_ref[0, 8:16, :] = p_grad

        @pl.when(h > 0)
        def _acc():
            acc_ref[0, 0:8, :] += p_rec
            acc_ref[0, 8:16, :] += p_grad

    return kernel


def lpips_with_discriminator_forward(inputs, reconstructions, post_mean,
                                     post_logvar, logvar_param,
                                     split="train", tile_h=None):
    """Mirrors LPIPSWithDiscriminator.forward (weights=None, perceptual off)."""
    B, C, H, W = inputs.shape
    assert C == 3, "GradLayer gray conversion expects 3 input channels"
    assert reconstructions.shape == inputs.shape
    assert reconstructions.dtype == inputs.dtype

    itemsize = jnp.dtype(inputs.dtype).itemsize
    # Minimal sublane-packed halo / tile granularity: 8 rows f32, 16 bf16, 32 i8.
    HB = max(8, 32 // max(itemsize, 1))
    assert H % HB == 0, (
        f"H={H} must be a multiple of {HB} for dtype {inputs.dtype}; "
        f"pad the image height before calling the loss kernel.")

    vmem_cap = _vmem_capacity_bytes()
    vmem_limit = int(min(64 * 1024 * 1024, (3 * vmem_cap) // 4))   # 64MiB / 48MiB(v7x)

    # ---- pick the H tile: biggest divisor of H (multiple of HB) in budget ----
    if tile_h is None:
        tile_budget = vmem_cap // 16                   # ~8 MiB per image tile (4 MiB on v7x)
        dma_rows = tile_budget // (3 * W * itemsize)   # native-dtype, double-buffered streams
        tmp_rows = (vmem_limit // 2) // (12 * W * 4)   # ~12 f32 (TH, W) temporaries
        budget_rows = max(HB, min(dma_rows, tmp_rows))
        cands = [t for t in range(HB, H + 1, HB) if H % t == 0]
        fitting = [t for t in cands if t <= budget_rows]
        TH = max(fitting) if fitting else min(cands)
    else:
        TH = int(tile_h)
        assert H % TH == 0 and TH % HB == 0, "bad tile_h"
    NH = H // TH
    RB = TH // HB                 # halo blocks per main tile
    n_hb = H // HB                # total halo blocks along H

    def main_map(b, h):
        return (b, 0, h, 0)

    def bot_map(b, h):            # block whose first row is global row (h+1)*TH
        return (b, 0, jnp.minimum((h + 1) * RB, n_hb - 1), 0)

    img_spec = pl.BlockSpec((1, 3, TH, W), main_map)
    bot_spec = pl.BlockSpec((1, 3, HB, W), bot_map)
    out_spec = pl.BlockSpec((1, 16, W), lambda b, h: (b, 0, 0))

    partials = pl.pallas_call(
        _make_loss_kernel(TH, W),
        out_shape=jax.ShapeDtypeStruct((B, 16, W), jnp.float32),
        grid_spec=pltpu.PrefetchScalarGridSpec(
            num_scalar_prefetch=0,
            grid=(B, NH),
            in_specs=[img_spec, img_spec, bot_spec, bot_spec],
            out_specs=out_spec,
            scratch_shapes=[pltpu.VMEM((2, 1, W), jnp.float32)],   # gray-row carry
        ),
        compiler_params=pltpu.CompilerParams(
            dimension_semantics=("parallel", "arbitrary"),
            vmem_limit_bytes=vmem_limit,
        ),
    )(inputs, reconstructions, inputs, reconstructions)

    # ---- scalar epilogue (logvar, *10, KL of the tiny posterior) -------------
    s_rec = jnp.sum(partials[:, 0:8, :])          # sum |x - x_hat|
    s_g = jnp.sum(partials[:, 8:16, :]) * 10.0    # sum |grad(x_hat)-grad(x)| * 10

    mu = post_mean.astype(jnp.float32)
    plv = post_logvar.astype(jnp.float32)
    kl_sum = 0.5 * jnp.sum(mu * mu + jnp.exp(plv) - 1.0 - plv)

    logvar = jnp.reshape(logvar_param, ()).astype(jnp.float32)
    inv_e = jnp.exp(-logvar)
    bsz = float(B)

    nll_loss = inv_e * s_rec / bsz + logvar * float(3 * H * W)
    g_loss = inv_e * s_g / bsz + logvar * float(H * W)
    kl_loss = kl_sum / bsz
    rec_mean = s_rec / float(B * 3 * H * W)
    loss = nll_loss + KL_WEIGHT * kl_loss + g_loss   # weighted_nll == nll (weights=None)

    log = {
        f"{split}/total_loss": loss,
        f"{split}/logvar": logvar_param,
        f"{split}/kl_loss": kl_loss,
        f"{split}/nll_loss": nll_loss,
        f"{split}/rec_loss": rec_mean,
        f"{split}/g_loss": g_loss,
    }
    return loss, log


# ----- pure-JAX reference (same math, no Pallas) for a sanity check ----------
def _reference_loss(inputs, recons, mean, plv, logvar):
    x = inputs.astype(jnp.float32)
    r = recons.astype(jnp.float32)
    rec_loss = jnp.abs(x - r)

    def grad_layer(t):
        c = jnp.asarray(GRAY_COEFFS, jnp.float32)
        g = (t * c[None, :, None, None]).sum(axis=1)            # [B,H,W]
        gp = jnp.pad(g, ((0, 0), (1, 1), (1, 1)))
        xv = gp[:, 2:, 1:-1] - gp[:, :-2, 1:-1]
        xh = gp[:, 1:-1, 2:] - gp[:, 1:-1, :-2]
        return jnp.sqrt(xv * xv + xh * xh + 1e-6)

    g_elem = jnp.abs(grad_layer(r) - grad_layer(x)) * 10.0
    lv = jnp.reshape(logvar, ()).astype(jnp.float32)
    nll = rec_loss / jnp.exp(lv) + lv
    gl = g_elem / jnp.exp(lv) + lv
    bsz = inputs.shape[0]
    nll_loss = jnp.sum(nll) / bsz
    g_loss = jnp.sum(gl) / bsz
    kl_loss = 0.5 * jnp.sum(mean * mean + jnp.exp(plv) - 1.0 - plv) / bsz
    return nll_loss + KL_WEIGHT * kl_loss + g_loss


if __name__ == "__main__":
    key = jax.random.PRNGKey(0)
    k1, k2, k3, k4 = jax.random.split(key, 4)

    B, C, H, W = 2, 3, 128, 128          # images (disc_in_channels=3), lane-dense W
    Zc, Zh, Zw = 4, 16, 16               # posterior latent shape

    inputs = jax.random.normal(k1, (B, C, H, W), jnp.float32)
    reconstructions = jax.random.normal(k2, (B, C, H, W), jnp.float32)
    post_mean = jax.random.normal(k3, (B, Zc, Zh, Zw), jnp.float32)
    post_logvar = 0.1 * jax.random.normal(k4, (B, Zc, Zh, Zw), jnp.float32)
    logvar_param = jnp.full((), LOGVAR_INIT, jnp.float32)   # nn.Parameter logvar

    # (1) f32, forced 32-row tiles (4 H-tiles/image, exercises halo + carry path)
    loss, log = lpips_with_discriminator_forward(
        inputs, reconstructions, post_mean, post_logvar, logvar_param,
        split="train", tile_h=32)
    jax.block_until_ready(loss)
    ref = _reference_loss(inputs, reconstructions, post_mean, post_logvar,
                          logvar_param)
    assert jnp.allclose(loss, ref, rtol=2e-4, atol=1e-2), (loss, ref)

    # (2) bf16 inputs (native-dtype DMA), auto tile size
    inputs_bf = inputs.astype(jnp.bfloat16)
    recons_bf = reconstructions.astype(jnp.bfloat16)
    loss_bf, _ = lpips_with_discriminator_forward(
        inputs_bf, recons_bf, post_mean, post_logvar, logvar_param,
        split="train")
    jax.block_until_ready(loss_bf)
    ref_bf = _reference_loss(inputs_bf, recons_bf, post_mean, post_logvar,
                             logvar_param)
    assert jnp.allclose(loss_bf, ref_bf, rtol=5e-4, atol=5e-2), (loss_bf, ref_bf)

    # (3) f32, H not a multiple of 16 (8-row tiling path, non-pow2 tiles)
    H2 = 72
    inp2 = jax.random.normal(k1, (B, C, H2, W), jnp.float32)
    rec2 = jax.random.normal(k2, (B, C, H2, W), jnp.float32)
    loss2, _ = lpips_with_discriminator_forward(
        inp2, rec2, post_mean, post_logvar, logvar_param,
        split="val", tile_h=24)
    jax.block_until_ready(loss2)
    ref2 = _reference_loss(inp2, rec2, post_mean, post_logvar, logvar_param)
    assert jnp.allclose(loss2, ref2, rtol=2e-4, atol=1e-2), (loss2, ref2)

    print("KERNEL_OK")
</pallas_src>

<mosaic_0001>
module attributes {stable_mosaic.version = 11 : i64} {
  func.func @kernel(%arg0: i32, %arg1: i32, %arg2: memref<1x3x32x128xf32, #tpu.memory_space<vmem>>, %arg3: memref<1x3x32x128xf32, #tpu.memory_space<vmem>>, %arg4: memref<1x3x8x128xf32, #tpu.memory_space<vmem>>, %arg5: memref<1x3x8x128xf32, #tpu.memory_space<vmem>>, %arg6: memref<1x16x128xf32, #tpu.memory_space<vmem>>, %arg7: memref<2x1x128xf32, #tpu.memory_space<vmem>>) attributes {dimension_semantics = [#tpu.dimension_semantics<parallel>, #tpu.dimension_semantics<arbitrary>], iteration_bounds = array<i64: 2, 4>, scalar_prefetch = 0 : i64, scratch_operands = 1 : i64, tpu.core_type = #tpu.core_type<tc>, window_params = [{transform_indices = @transform_0, window_bounds = array<i64: 1, 3, 32, 128>}, {transform_indices = @transform_1, window_bounds = array<i64: 1, 3, 32, 128>}, {transform_indices = @transform_2, window_bounds = array<i64: 1, 3, 8, 128>}, {transform_indices = @transform_3, window_bounds = array<i64: 1, 3, 8, 128>}, {transform_indices = @transform_4, window_bounds = array<i64: 1, 16, 128>}]} {
    %c0_i32 = arith.constant 0 : i32
    %0 = arith.cmpi eq, %arg1, %c0_i32 : i32
    %c3_i32 = arith.constant 3 : i32
    %1 = arith.cmpi eq, %arg1, %c3_i32 : i32
    %c0 = arith.constant 0 : index
    %c0_0 = arith.constant 0 : index
    %c0_1 = arith.constant 0 : index
    %c0_2 = arith.constant 0 : index
    %2 = vector.load %arg2[%c0, %c0_0, %c0_1, %c0_2] : memref<1x3x32x128xf32, #tpu.memory_space<vmem>>, vector<1x3x32x128xf32>
    %3 = vector.shape_cast %2 : vector<1x3x32x128xf32> to vector<3x32x128xf32>
    %c0_3 = arith.constant 0 : index
    %c0_4 = arith.constant 0 : index
    %c0_5 = arith.constant 0 : index
    %c0_6 = arith.constant 0 : index
    %4 = vector.load %arg3[%c0_3, %c0_4, %c0_5, %c0_6] : memref<1x3x32x128xf32, #tpu.memory_space<vmem>>, vector<1x3x32x128xf32>
    %5 = vector.shape_cast %4 : vector<1x3x32x128xf32> to vector<3x32x128xf32>
    %6 = arith.subf %3, %5 : vector<3x32x128xf32>
    %7 = math.absf %6 : vector<3x32x128xf32>
    %cst = arith.constant dense<0.000000e+00> : vector<32x128xf32>
    %8 = vector.multi_reduction <add>, %7, %cst [0] : vector<3x32x128xf32> to vector<32x128xf32>
    %9 = vector.extract_strided_slice %3 {offsets = [0, 0, 0], sizes = [1, 32, 128], strides = [1, 1, 1]} : vector<3x32x128xf32> to vector<1x32x128xf32>
    %10 = vector.shape_cast %9 : vector<1x32x128xf32> to vector<32x128xf32>
    %cst_7 = arith.constant 0.256789058 : f32
    %11 = vector.broadcast %cst_7 : f32 to vector<32x128xf32>
    %12 = arith.mulf %10, %11 : vector<32x128xf32>
    %13 = vector.extract_strided_slice %3 {offsets = [1, 0, 0], sizes = [1, 32, 128], strides = [1, 1, 1]} : vector<3x32x128xf32> to vector<1x32x128xf32>
    %14 = vector.shape_cast %13 : vector<1x32x128xf32> to vector<32x128xf32>
    %cst_8 = arith.constant 0.504128933 : f32
    %15 = vector.broadcast %cst_8 : f32 to vector<32x128xf32>
    %16 = arith.mulf %14, %15 : vector<32x128xf32>
    %17 = arith.addf %12, %16 : vector<32x128xf32>
    %18 = vector.extract_strided_slice %3 {offsets = [2, 0, 0], sizes = [1, 32, 128], strides = [1, 1, 1]} : vector<3x32x128xf32> to vector<1x32x128xf32>
    %19 = vector.shape_cast %18 : vector<1x32x128xf32> to vector<32x128xf32>
    %cst_9 = arith.constant 0.0979062467 : f32
    %20 = vector.broadcast %cst_9 : f32 to vector<32x128xf32>
    %21 = arith.mulf %19, %20 : vector<32x128xf32>
    %22 = arith.addf %17, %21 : vector<32x128xf32>
    %23 = vector.extract_strided_slice %5 {offsets = [0, 0, 0], sizes = [1, 32, 128], strides = [1, 1, 1]} : vector<3x32x128xf32> to vector<1x32x128xf32>
    %24 = vector.shape_cast %23 : vector<1x32x128xf32> to vector<32x128xf32>
    %cst_10 = arith.constant 0.256789058 : f32
    %25 = vector.broadcast %cst_10 : f32 to vector<32x128xf32>
    %26 = arith.mulf %24, %25 : vector<32x128xf32>
    %27 = vector.extract_strided_slice %5 {offsets = [1, 0, 0], sizes = [1, 32, 128], strides = [1, 1, 1]} : vector<3x32x128xf32> to vector<1x32x128xf32>
    %28 = vector.shape_cast %27 : vector<1x32x128xf32> to vector<32x128xf32>
    %cst_11 = arith.constant 0.504128933 : f32
    %29 = vector.broadcast %cst_11 : f32 to vector<32x128xf32>
    %30 = arith.mulf %28, %29 : vector<32x128xf32>
    %31 = arith.addf %26, %30 : vector<32x128xf32>
    %32 = vector.extract_strided_slice %5 {offsets = [2, 0, 0], sizes = [1, 32, 128], strides = [1, 1, 1]} : vector<3x32x128xf32> to vector<1x32x128xf32>
    %33 = vector.shape_cast %32 : vector<1x32x128xf32> to vector<32x128xf32>
    %cst_12 = arith.constant 0.0979062467 : f32
    %34 = vector.broadcast %cst_12 : f32 to vector<32x128xf32>
    %35 = arith.mulf %33, %34 : vector<32x128xf32>
    %36 = arith.addf %31, %35 : vector<32x128xf32>
    %cst_13 = arith.constant 0.000000e+00 : f32
    %37 = vector.broadcast %cst_13 : f32 to vector<1x128xf32>
    %c0_14 = arith.constant 0 : index
    %c0_15 = arith.constant 0 : index
    %c0_16 = arith.constant 0 : index
    %38 = vector.load %arg7[%c0_14, %c0_15, %c0_16] : memref<2x1x128xf32, #tpu.memory_space<vmem>>, vector<1x1x128xf32>
    %39 = vector.shape_cast %38 : vector<1x1x128xf32> to vector<1x128xf32>
    %40 = arith.select %0, %37, %39 : vector<1x128xf32>
    %c1 = arith.constant 1 : index
    %c0_17 = arith.constant 0 : index
    %c0_18 = arith.constant 0 : index
    %41 = vector.load %arg7[%c1, %c0_17, %c0_18] : memref<2x1x128xf32, #tpu.memory_space<vmem>>, vector<1x1x128xf32>
    %42 = vector.shape_cast %41 : vector<1x1x128xf32> to vector<1x128xf32>
    %43 = arith.select %0, %37, %42 : vector<1x128xf32>
    %c0_19 = arith.constant 0 : index
    %c0_20 = arith.constant 0 : index
    %c0_21 = arith.constant 0 : index
    %c0_22 = arith.constant 0 : index
    %44 = vector.load %arg4[%c0_19, %c0_20, %c0_21, %c0_22] : memref<1x3x8x128xf32, #tpu.memory_space<vmem>>, vector<1x3x1x128xf32>
    %45 = vector.shape_cast %44 : vector<1x3x1x128xf32> to vector<3x1x128xf32>
    %46 = vector.extract_strided_slice %45 {offsets = [0, 0, 0], sizes = [1, 1, 128], strides = [1, 1, 1]} : vector<3x1x128xf32> to vector<1x1x128xf32>
    %47 = vector.shape_cast %46 : vector<1x1x128xf32> to vector<1x128xf32>
    %cst_23 = arith.constant 0.256789058 : f32
    %48 = vector.broadcast %cst_23 : f32 to vector<1x128xf32>
    %49 = arith.mulf %47, %48 : vector<1x128xf32>
    %50 = vector.extract_strided_slice %45 {offsets = [1, 0, 0], sizes = [1, 1, 128], strides = [1, 1, 1]} : vector<3x1x128xf32> to vector<1x1x128xf32>
    %51 = vector.shape_cast %50 : vector<1x1x128xf32> to vector<1x128xf32>
    %cst_24 = arith.constant 0.504128933 : f32
    %52 = vector.broadcast %cst_24 : f32 to vector<1x128xf32>
    %53 = arith.mulf %51, %52 : vector<1x128xf32>
    %54 = arith.addf %49, %53 : vector<1x128xf32>
    %55 = vector.extract_strided_slice %45 {offsets = [2, 0, 0], sizes = [1, 1, 128], strides = [1, 1, 1]} : vector<3x1x128xf32> to vector<1x1x128xf32>
    %56 = vector.shape_cast %55 : vector<1x1x128xf32> to vector<1x128xf32>
    %cst_25 = arith.constant 0.0979062467 : f32
    %57 = vector.broadcast %cst_25 : f32 to vector<1x128xf32>
    %58 = arith.mulf %56, %57 : vector<1x128xf32>
    %59 = arith.addf %54, %58 : vector<1x128xf32>
    %60 = arith.select %1, %37, %59 : vector<1x128xf32>
    %c0_26 = arith.constant 0 : index
    %c0_27 = arith.constant 0 : index
    %c0_28 = arith.constant 0 : index
    %c0_29 = arith.constant 0 : index
    %61 = vector.load %arg5[%c0_26, %c0_27, %c0_28, %c0_29] : memref<1x3x8x128xf32, #tpu.memory_space<vmem>>, vector<1x3x1x128xf32>
    %62 = vector.shape_cast %61 : vector<1x3x1x128xf32> to vector<3x1x128xf32>
    %63 = vector.extract_strided_slice %62 {offsets = [0, 0, 0], sizes = [1, 1, 128], strides = [1, 1, 1]} : vector<3x1x128xf32> to vector<1x1x128xf32>
    %64 = vector.shape_cast %63 : vector<1x1x128xf32> to vector<1x128xf32>
    %cst_30 = arith.constant 0.256789058 : f32
    %65 = vector.broadcast %cst_30 : f32 to vector<1x128xf32>
    %66 = arith.mulf %64, %65 : vector<1x128xf32>
    %67 = vector.extract_strided_slice %62 {offsets = [1, 0, 0], sizes = [1, 1, 128], strides = [1, 1, 1]} : vector<3x1x128xf32> to vector<1x1x128xf32>
    %68 = vector.shape_cast %67 : vector<1x1x128xf32> to vector<1x128xf32>
    %cst_31 = arith.constant 0.504128933 : f32
    %69 = vector.broadcast %cst_31 : f32 to vector<1x128xf32>
    %70 = arith.mulf %68, %69 : vector<1x128xf32>
    %71 = arith.addf %66, %70 : vector<1x128xf32>
    %72 = vector.extract_strided_slice %62 {offsets = [2, 0, 0], sizes = [1, 1, 128], strides = [1, 1, 1]} : vector<3x1x128xf32> to vector<1x1x128xf32>
    %73 = vector.shape_cast %72 : vector<1x1x128xf32> to vector<1x128xf32>
    %cst_32 = arith.constant 0.0979062467 : f32
    %74 = vector.broadcast %cst_32 : f32 to vector<1x128xf32>
    %75 = arith.mulf %73, %74 : vector<1x128xf32>
    %76 = arith.addf %71, %75 : vector<1x128xf32>
    %77 = arith.select %1, %37, %76 : vector<1x128xf32>
    %78 = tpu.iota {dimensions = array<i32: 0>} : vector<32x128xi32>
    %79 = tpu.iota {dimensions = array<i32: 1>} : vector<32x128xi32>
    %c0_i32_33 = arith.constant 0 : i32
    %80 = vector.broadcast %c0_i32_33 : i32 to vector<32x128xi32>
    %81 = arith.cmpi eq, %78, %80 : vector<32x128xi32>
    %c31_i32 = arith.constant 31 : i32
    %82 = vector.broadcast %c31_i32 : i32 to vector<32x128xi32>
    %83 = arith.cmpi eq, %78, %82 : vector<32x128xi32>
    %c0_i32_34 = arith.constant 0 : i32
    %84 = vector.broadcast %c0_i32_34 : i32 to vector<32x128xi32>
    %85 = arith.cmpi eq, %79, %84 : vector<32x128xi32>
    %c127_i32 = arith.constant 127 : i32
    %86 = vector.broadcast %c127_i32 : i32 to vector<32x128xi32>
    %87 = arith.cmpi eq, %79, %86 : vector<32x128xi32>
    %c1_i32 = arith.constant 1 : i32
    %88 = tpu.dynamic_rotate %22 by %c1_i32 dim 0 : vector<32x128xf32>, i32 -> vector<32x128xf32>
    %89 = vector.shape_cast %40 : vector<1x128xf32> to vector<1x128xf32>
    %90 = vector.broadcast %89 : vector<1x128xf32> to vector<32x128xf32>
    %91 = arith.select %81, %90, %88 : vector<32x128xi1>, vector<32x128xf32>
    %c31_i32_35 = arith.constant 31 : i32
    %92 = tpu.dynamic_rotate %22 by %c31_i32_35 dim 0 : vector<32x128xf32>, i32 -> vector<32x128xf32>
    %93 = vector.shape_cast %60 : vector<1x128xf32> to vector<1x128xf32>
    %94 = vector.broadcast %93 : vector<1x128xf32> to vector<32x128xf32>
    %95 = arith.select %83, %94, %92 : vector<32x128xi1>, vector<32x128xf32>
    %c1_i32_36 = arith.constant 1 : i32
    %96 = tpu.dynamic_rotate %22 by %c1_i32_36 dim 1 : vector<32x128xf32>, i32 -> vector<32x128xf32>
    %cst_37 = arith.constant 0.000000e+00 : f32
    %97 = vector.broadcast %cst_37 : f32 to vector<32x128xf32>
    %98 = arith.select %85, %97, %96 : vector<32x128xi1>, vector<32x128xf32>
    %c127_i32_38 = arith.constant 127 : i32
    %99 = tpu.dynamic_rotate %22 by %c127_i32_38 dim 1 : vector<32x128xf32>, i32 -> vector<32x128xf32>
    %cst_39 = arith.constant 0.000000e+00 : f32
    %100 = vector.broadcast %cst_39 : f32 to vector<32x128xf32>
    %101 = arith.select %87, %100, %99 : vector<32x128xi1>, vector<32x128xf32>
    %102 = arith.subf %95, %91 : vector<32x128xf32>
    %103 = arith.subf %101, %98 : vector<32x128xf32>
    %104 = arith.mulf %102, %102 : vector<32x128xf32>
    %105 = arith.mulf %103, %103 : vector<32x128xf32>
    %106 = arith.addf %104, %105 : vector<32x128xf32>
    %cst_40 = arith.constant 9.99999997E-7 : f32
    %107 = vector.broadcast %cst_40 : f32 to vector<32x128xf32>
    %108 = arith.addf %106, %107 : vector<32x128xf32>
    %109 = math.sqrt %108 : vector<32x128xf32>
    %c1_i32_41 = arith.constant 1 : i32
    %110 = tpu.dynamic_rotate %36 by %c1_i32_41 dim 0 : vector<32x128xf32>, i32 -> vector<32x128xf32>
    %111 = vector.shape_cast %43 : vector<1x128xf32> to vector<1x128xf32>
    %112 = vector.broadcast %111 : vector<1x128xf32> to vector<32x128xf32>
    %113 = arith.select %81, %112, %110 : vector<32x128xi1>, vector<32x128xf32>
    %c31_i32_42 = arith.constant 31 : i32
    %114 = tpu.dynamic_rotate %36 by %c31_i32_42 dim 0 : vector<32x128xf32>, i32 -> vector<32x128xf32>
    %115 = vector.shape_cast %77 : vector<1x128xf32> to vector<1x128xf32>
    %116 = vector.broadcast %115 : vector<1x128xf32> to vector<32x128xf32>
    %117 = arith.select %83, %116, %114 : vector<32x128xi1>, vector<32x128xf32>
    %c1_i32_43 = arith.constant 1 : i32
    %118 = tpu.dynamic_rotate %36 by %c1_i32_43 dim 1 : vector<32x128xf32>, i32 -> vector<32x128xf32>
    %cst_44 = arith.constant 0.000000e+00 : f32
    %119 = vector.broadcast %cst_44 : f32 to vector<32x128xf32>
    %120 = arith.select %85, %119, %118 : vector<32x128xi1>, vector<32x128xf32>
    %c127_i32_45 = arith.constant 127 : i32
    %121 = tpu.dynamic_rotate %36 by %c127_i32_45 dim 1 : vector<32x128xf32>, i32 -> vector<32x128xf32>
    %cst_46 = arith.constant 0.000000e+00 : f32
    %122 = vector.broadcast %cst_46 : f32 to vector<32x128xf32>
    %123 = arith.select %87, %122, %121 : vector<32x128xi1>, vector<32x128xf32>
    %124 = arith.subf %117, %113 : vector<32x128xf32>
    %125 = arith.subf %123, %120 : vector<32x128xf32>
    %126 = arith.mulf %124, %124 : vector<32x128xf32>
    %127 = arith.mulf %125, %125 : vector<32x128xf32>
    %128 = arith.addf %126, %127 : vector<32x128xf32>
    %cst_47 = arith.constant 9.99999997E-7 : f32
    %129 = vector.broadcast %cst_47 : f32 to vector<32x128xf32>
    %130 = arith.addf %128, %129 : vector<32x128xf32>
    %131 = math.sqrt %130 : vector<32x128xf32>
    %132 = arith.subf %131, %109 : vector<32x128xf32>
    %133 = math.absf %132 : vector<32x128xf32>
    %134 = vector.extract_strided_slice %22 {offsets = [31, 0], sizes = [1, 128], strides = [1, 1]} : vector<32x128xf32> to vector<1x128xf32>
    %c0_48 = arith.constant 0 : index
    %c0_49 = arith.constant 0 : index
    %c0_50 = arith.constant 0 : index
    %135 = vector.load %arg7[%c0_48, %c0_49, %c0_50] : memref<2x1x128xf32, #tpu.memory_space<vmem>>, vector<1x1x128xf32>
    %136 = vector.shape_cast %135 : vector<1x1x128xf32> to vector<1x128xf32>
    %137 = vector.shape_cast %134 : vector<1x128xf32> to vector<1x1x128xf32>
    tpu.vector_store %arg7[%c0_48, %c0_49, %c0_50], %137 {strides = array<i32>} : memref<2x1x128xf32, #tpu.memory_space<vmem>>, vector<1x1x128xf32>,
    %138 = vector.extract_strided_slice %36 {offsets = [31, 0], sizes = [1, 128], strides = [1, 1]} : vector<32x128xf32> to vector<1x128xf32>
    %c1_51 = arith.constant 1 : index
    %c0_52 = arith.constant 0 : index
    %c0_53 = arith.constant 0 : index
    %139 = vector.load %arg7[%c1_51, %c0_52, %c0_53] : memref<2x1x128xf32, #tpu.memory_space<vmem>>, vector<1x1x128xf32>
    %140 = vector.shape_cast %139 : vector<1x1x128xf32> to vector<1x128xf32>
    %141 = vector.shape_cast %138 : vector<1x128xf32> to vector<1x1x128xf32>
    tpu.vector_store %arg7[%c1_51, %c0_52, %c0_53], %141 {strides = array<i32>} : memref<2x1x128xf32, #tpu.memory_space<vmem>>, vector<1x1x128xf32>,
    %142 = vector.shape_cast %8 : vector<32x128xf32> to vector<4x8x128xf32>
    %cst_54 = arith.constant dense<0.000000e+00> : vector<8x128xf32>
    %143 = vector.multi_reduction <add>, %142, %cst_54 [0] : vector<4x8x128xf32> to vector<8x128xf32>
    %144 = vector.shape_cast %133 : vector<32x128xf32> to vector<4x8x128xf32>
    %cst_55 = arith.constant dense<0.000000e+00> : vector<8x128xf32>
    %145 = vector.multi_reduction <add>, %144, %cst_55 [0] : vector<4x8x128xf32> to vector<8x128xf32>
    %146 = arith.extui %0 : i1 to i32
    %c0_i32_56 = arith.constant 0 : i32
    %147 = arith.cmpi ne, %146, %c0_i32_56 : i32
    scf.if %147 {
      %c0_59 = arith.constant 0 : index
      %c0_60 = arith.constant 0 : index
      %c0_61 = arith.constant 0 : index
      %151 = vector.load %arg6[%c0_59, %c0_60, %c0_61] : memref<1x16x128xf32, #tpu.memory_space<vmem>>, vector<1x8x128xf32>
      %152 = vector.shape_cast %151 : vector<1x8x128xf32> to vector<8x128xf32>
      %153 = vector.shape_cast %143 : vector<8x128xf32> to vector<1x8x128xf32>
      tpu.vector_store %arg6[%c0_59, %c0_60, %c0_61], %153 {strides = array<i32>} : memref<1x16x128xf32, #tpu.memory_space<vmem>>, vector<1x8x128xf32>,
      %c0_62 = arith.constant 0 : index
      %c8 = arith.constant 8 : index
      %c0_63 = arith.constant 0 : index
      %154 = vector.load %arg6[%c0_62, %c8, %c0_63] : memref<1x16x128xf32, #tpu.memory_space<vmem>>, vector<1x8x128xf32>
      %155 = vector.shape_cast %154 : vector<1x8x128xf32> to vector<8x128xf32>
      %156 = vector.shape_cast %145 : vector<8x128xf32> to vector<1x8x128xf32>
      tpu.vector_store %arg6[%c0_62, %c8, %c0_63], %156 {strides = array<i32>} : memref<1x16x128xf32, #tpu.memory_space<vmem>>, vector<1x8x128xf32>,
    } else {
    }
    %c0_i32_57 = arith.constant 0 : i32
    %148 = arith.cmpi sgt, %arg1, %c0_i32_57 : i32
    %149 = arith.extui %148 : i1 to i32
    %c0_i32_58 = arith.constant 0 : i32
    %150 = arith.cmpi ne, %149, %c0_i32_58 : i32
    scf.if %150 {
      %c0_59 = arith.constant 0 : index
      %c0_60 = arith.constant 0 : index
      %c0_61 = arith.constant 0 : index
      %151 = vector.load %arg6[%c0_59, %c0_60, %c0_61] : memref<1x16x128xf32, #tpu.memory_space<vmem>>, vector<1x8x128xf32>
      %152 = vector.shape_cast %151 : vector<1x8x128xf32> to vector<8x128xf32>
      %153 = arith.addf %152, %143 : vector<8x128xf32>
      %c0_62 = arith.constant 0 : index
      %c0_63 = arith.constant 0 : index
      %c0_64 = arith.constant 0 : index
      %154 = vector.load %arg6[%c0_62, %c0_63, %c0_64] : memref<1x16x128xf32, #tpu.memory_space<vmem>>, vector<1x8x128xf32>
      %155 = vector.shape_cast %154 : vector<1x8x128xf32> to vector<8x128xf32>
      %156 = vector.shape_cast %153 : vector<8x128xf32> to vector<1x8x128xf32>
      tpu.vector_store %arg6[%c0_62, %c0_63, %c0_64], %156 {strides = array<i32>} : memref<1x16x128xf32, #tpu.memory_space<vmem>>, vector<1x8x128xf32>,
      %c0_65 = arith.constant 0 : index
      %c8 = arith.constant 8 : index
      %c0_66 = arith.constant 0 : index
      %157 = vector.load %arg6[%c0_65, %c8, %c0_66] : memref<1x16x128xf32, #tpu.memory_space<vmem>>, vector<1x8x128xf32>
      %158 = vector.shape_cast %157 : vector<1x8x128xf32> to vector<8x128xf32>
      %159 = arith.addf %158, %145 : vector<8x128xf32>
      %c0_67 = arith.constant 0 : index
      %c8_68 = arith.constant 8 : index
      %c0_69 = arith.constant 0 : index
      %160 = vector.load %arg6[%c0_67, %c8_68, %c0_69] : memref<1x16x128xf32, #tpu.memory_space<vmem>>, vector<1x8x128xf32>
      %161 = vector.shape_cast %160 : vector<1x8x128xf32> to vector<8x128xf32>
      %162 = vector.shape_cast %159 : vector<8x128xf32> to vector<1x8x128xf32>
      tpu.vector_store %arg6[%c0_67, %c8_68, %c0_69], %162 {strides = array<i32>} : memref<1x16x128xf32, #tpu.memory_space<vmem>>, vector<1x8x128xf32>,
    } else {
    }
    return
  }
  func.func @transform_0(%arg0: i32, %arg1: i32) -> (i32, i32, i32, i32) {
    %c0_i32 = arith.constant 0 : i32
    %c0_i32_0 = arith.constant 0 : i32
    %c0_i32_1 = arith.constant 0 : i32
    return %arg0, %c0_i32, %arg1, %c0_i32_0 : i32, i32, i32, i32
  }
  func.func @transform_1(%arg0: i32, %arg1: i32) -> (i32, i32, i32, i32) {
    %c0_i32 = arith.constant 0 : i32
    %c0_i32_0 = arith.constant 0 : i32
    %c0_i32_1 = arith.constant 0 : i32
    return %arg0, %c0_i32, %arg1, %c0_i32_0 : i32, i32, i32, i32
  }
  func.func @transform_2(%arg0: i32, %arg1: i32) -> (i32, i32, i32, i32) {
    %c1_i32 = arith.constant 1 : i32
    %0 = arith.addi %arg1, %c1_i32 : i32
    %c4_i32 = arith.constant 4 : i32
    %1 = arith.muli %0, %c4_i32 : i32
    %c15_i32 = arith.constant 15 : i32
    %2 = arith.minsi %1, %c15_i32 : i32
    %c0_i32 = arith.constant 0 : i32
    %c0_i32_0 = arith.constant 0 : i32
    %c0_i32_1 = arith.constant 0 : i32
    return %arg0, %c0_i32, %2, %c0_i32_0 : i32, i32, i32, i32
  }
  func.func @transform_3(%arg0: i32, %arg1: i32) -> (i32, i32, i32, i32) {
    %c1_i32 = arith.constant 1 : i32
    %0 = arith.addi %arg1, %c1_i32 : i32
    %c4_i32 = arith.constant 4 : i32
    %1 = arith.muli %0, %c4_i32 : i32
    %c15_i32 = arith.constant 15 : i32
    %2 = arith.minsi %1, %c15_i32 : i32
    %c0_i32 = arith.constant 0 : i32
    %c0_i32_0 = arith.constant 0 : i32
    %c0_i32_1 = arith.constant 0 : i32
    return %arg0, %c0_i32, %2, %c0_i32_0 : i32, i32, i32, i32
  }
  func.func @transform_4(%arg0: i32, %arg1: i32) -> (i32, i32, i32) {
    %c0_i32 = arith.constant 0 : i32
    %c0_i32_0 = arith.constant 0 : i32
    %c0_i32_1 = arith.constant 0 : i32
    return %arg0, %c0_i32, %c0_i32_0 : i32, i32, i32
  }
}

</mosaic_0001>

<llo_original>
// kernel: tpu_custom_call.1
$region0: #{tpu_custom_call.1}
  #allocation0 [shape = 'u32[]', space=smem, size = 0x4, offset = 0x4, fixed_abs, tag = 'smem constant byte address 0x4 - core index']
  #allocation1 [shape = 'u32[144,128]{1,0:T(1,128)}', space=vmem, size = 0x12000, scoped, tag = 'internal scratch']
  #allocation2 [shape = 'f32[2,1,128]{2,1,0:T(1,128)}', space=vmem, size = 0x400, scoped, tag = 'scratch operand']
  #allocation12 [shape = 's32[]', space=sflag, size = 0x4, offset = 0, fixed_abs, tag = 'sflag constant byte address 0x0 - dummy sync flag']
  #allocation14 [shape = 's32[]', space=sflag, size = 0x4, offset = 0, fixed_abs, tag = 'sflag constant byte address 0x0 - dummy sync flag']
  %s0 = inlined_call_operand.hbm [shape: f32[2,3,128,128], index: 0, kind: input, shape index: {}]
  %s1 = inlined_call_operand.hbm [shape: f32[2,3,128,128], index: 1, kind: input, shape index: {}]
  %s2 = inlined_call_operand.hbm [shape: f32[2,3,128,128], index: 2, kind: input, shape index: {}]
  %s3 = inlined_call_operand.hbm [shape: f32[2,3,128,128], index: 3, kind: input, shape index: {}]
  %s4 = inlined_call_operand.hbm [shape: f32[2,16,128], index: 4, kind: output, shape index: {}]
  %s5 = sld [smem:[#allocation0]]
  $region73: #{tpu_custom_call.1} parent=0
    _
  %s7 = ssub.s32 1, %s5
  %s8 = scalar_select 0, %s7, %s5
  $region1: #{tpu_custom_call.1} parent=0
    #allocation3 [shape = 'u8[98304]{0}', space=vmem, size = 0x18000, scoped, tag = 'input window, operand 0']
    #allocation4 [shape = 's32[2]{0}', space=sflag, size = 0x8, scoped, tag = 'scoped memory for tpu_custom_call.1']
    #allocation5 [shape = 's32[2]{0}', space=sflag, size = 0x8, scoped, tag = 'scoped memory for tpu_custom_call.1']
    #allocation6 [shape = 'u8[98304]{0}', space=vmem, size = 0x18000, scoped, tag = 'input window, operand 1']
    #allocation7 [shape = 's32[2]{0}', space=sflag, size = 0x8, scoped, tag = 'scoped memory for tpu_custom_call.1']
    #allocation8 [shape = 'u8[24576]{0}', space=vmem, size = 0x6000, scoped, tag = 'input window, operand 2']
    #allocation9 [shape = 'u8[24576]{0}', space=vmem, size = 0x6000, scoped, tag = 'input window, operand 3']
    #allocation10 [shape = 's32[2]{0}', space=sflag, size = 0x8, scoped, tag = 'scoped memory for tpu_custom_call.1']
    #allocation11 [shape = 'u8[16384]{0}', space=vmem, size = 0x4000, scoped, tag = 'output window, operand 0']
    %9 = vsyncpa [#allocation4], 0
    %s10 = scalar_lea.sflag [#allocation4], 1
    %11 = vsyncpa %s10, 0
    %12 = vsyncpa [#allocation7], 0
    %s13 = scalar_lea.sflag [#allocation7], 1
    %14 = vsyncpa %s13, 0
    %15 = vsyncpa [#allocation10], 0
    %s16 = scalar_lea.sflag [#allocation10], 1
    %17 = vsyncpa %s16, 0
    %18 = vsyncpa [#allocation5], 0
    %s19 = scalar_lea.sflag [#allocation5], 1
    %20 = vsyncpa %s19, 0
    loop: start=0, step=1, limit=10
    $region2: #{tpu_custom_call.1} parent=1 // loop_pre_header
      _
    $region3: #{tpu_custom_call.1} parent=1 // loop_header
      %s22 = sphi 0, %s26
      %p23 = scmp.ge.s32.totalorder %s22, 10
      %s29 = sphi 0, %s41
      %s30 = sphi 0, %s37
      %s31 = sphi 0, %s29
      %s32 = sphi 0, %s30
      %s33 = sphi 0, %s31
      %s34 = sphi 0, %s32
      %s46 = sphi 0, %s48
      %s49 = sphi 0, %s46
      %s50 = sphi 0, %s49
      %s66 = sphi 0, %s50
      %s74 = sphi 0, %s76
      %s77 = sphi 0, %s74
      %s78 = sphi 0, %s77
      %s94 = sphi 0, %s78
      %s110 = sphi 0, %s112
      %s113 = sphi 0, %s110
      %s114 = sphi 0, %s113
      %s130 = sphi 0, %s114
      %s146 = sphi 0, %s148
      %s149 = sphi 0, %s146
      %s150 = sphi 0, %s149
      %s166 = sphi 0, %s150
      %s172 = sphi 0, %s174
      %s175 = sphi 0, %s172
      %s176 = sphi 0, %s175
      %s192 = sphi 0, %s176
    $region4: #{tpu_custom_call.1} parent=1 // loop_header_branch
      %25 = sbr.rel (%p23) target = $region8
    $region5: #{tpu_custom_call.1} parent=1 // loop_body
      %s27 = ssub.s32 %s22, 1
      %s28 = ssub.s32 %s22, 2
      %s35 = sadd.s32 1, %s30
      %p36 = scmp.ge.s32.totalorder %s35, 4
      %s37 = scalar_select %p36, 0, %s35
      %s38 = sadd.s32 1, %s29
      %s39 = scalar_select %p36, %s38, %s29
      %p40 = scmp.ge.s32.totalorder %s39, 2
      %s41 = scalar_select %p40, 0, %s39
      %s42 = ssub.s32 %s29, %s41
      %s43 = ssub.s32 %s30, %s37
      %s44 = sor.u32 %s42, %s43
      %p45 = scmp.eq.s32.totalorder %s44, 0
      %s47 = sadd.s32 %s46, 1
      %s48 = scalar_select %p45, %s46, %s47
      %p51 = pneg %p45
      %p52 = scmp.eq.s32.totalorder %s22, 7
      %p53 = por %p51, %p52
      %p54 = scmp.ne.s32.totalorder %s46, %s49
      %p55 = scmp.eq.s32.totalorder %s22, 0
      %p56 = por %p54, %p55
      %p57 = scmp.ne.s32.totalorder %s46, %s49
      %p58 = scmp.eq.s32.totalorder %s27, 7
      %p59 = por %p57, %p58
      %p60 = scmp.ne.s32.totalorder %s49, %s50
      %p61 = scmp.eq.s32.totalorder %s27, 0
      %p62 = por %p60, %p61
      %p63 = scmp.ne.s32.totalorder %s49, %s50
      %p64 = scmp.eq.s32.totalorder %s28, 7
      %p65 = por %p63, %p64
      %p67 = scmp.ne.s32.totalorder %s50, %s66
      %p68 = scmp.eq.s32.totalorder %s28, 0
      %p69 = por %p67, %p68
      %s70 = ssub.s32 %s29, %s41
      %s71 = ssub.s32 %s30, %s37
      %s72 = sor.u32 %s70, %s71
      %p73 = scmp.eq.s32.totalorder %s72, 0
      %s75 = sadd.s32 %s74, 1
      %s76 = scalar_select %p73, %s74, %s75
      %p79 = pneg %p73
      %p80 = scmp.eq.s32.totalorder %s22, 7
      %p81 = por %p79, %p80
      %p82 = scmp.ne.s32.totalorder %s74, %s77
      %p83 = scmp.eq.s32.totalorder %s22, 0
      %p84 = por %p82, %p83
      %p85 = scmp.ne.s32.totalorder %s74, %s77
      %p86 = scmp.eq.s32.totalorder %s27, 7
      %p87 = por %p85, %p86
      %p88 = scmp.ne.s32.totalorder %s77, %s78
      %p89 = scmp.eq.s32.totalorder %s27, 0
      %p90 = por %p88, %p89
      %p91 = scmp.ne.s32.totalorder %s77, %s78
      %p92 = scmp.eq.s32.totalorder %s28, 7
      %p93 = por %p91, %p92
      %p95 = scmp.ne.s32.totalorder %s78, %s94
      %p96 = scmp.eq.s32.totalorder %s28, 0
      %p97 = por %p95, %p96
      %s98 = sadd.s32 %s30, 1
      %s99 = smul.u32 %s98, 4
      %p100 = scmp.lt.s32.totalorder %s99, 15
      %s101 = scalar_select %p100, %s99, 15
      %s102 = sadd.s32 %s37, 1
      %s103 = smul.u32 %s102, 4
      %p104 = scmp.lt.s32.totalorder %s103, 15
      %s105 = scalar_select %p104, %s103, 15
      %s106 = ssub.s32 %s29, %s41
      %s107 = ssub.s32 %s101, %s105
      %s108 = sor.u32 %s106, %s107
      %p109 = scmp.eq.s32.totalorder %s108, 0
      %s111 = sadd.s32 %s110, 1
      %s112 = scalar_select %p109, %s110, %s111
      %p115 = pneg %p109
      %p116 = scmp.eq.s32.totalorder %s22, 7
      %p117 = por %p115, %p116
      %p118 = scmp.ne.s32.totalorder %s110, %s113
      %p119 = scmp.eq.s32.totalorder %s22, 0
      %p120 = por %p118, %p119
      %p121 = scmp.ne.s32.totalorder %s110, %s113
      %p122 = scmp.eq.s32.totalorder %s27, 7
      %p123 = por %p121, %p122
      %p124 = scmp.ne.s32.totalorder %s113, %s114
      %p125 = scmp.eq.s32.totalorder %s27, 0
      %p126 = por %p124, %p125
      %p127 = scmp.ne.s32.totalorder %s113, %s114
      %p128 = scmp.eq.s32.totalorder %s28, 7
      %p129 = por %p127, %p128
      %p131 = scmp.ne.s32.totalorder %s114, %s130
      %p132 = scmp.eq.s32.totalorder %s28, 0
      %p133 = por %p131, %p132
      %s134 = sadd.s32 %s30, 1
      %s135 = smul.u32 %s134, 4
      %p136 = scmp.lt.s32.totalorder %s135, 15
      %s137 = scalar_select %p136, %s135, 15
      %s138 = sadd.s32 %s37, 1
      %s139 = smul.u32 %s138, 4
      %p140 = scmp.lt.s32.totalorder %s139, 15
      %s141 = scalar_select %p140, %s139, 15
      %s142 = ssub.s32 %s29, %s41
      %s143 = ssub.s32 %s137, %s141
      %s144 = sor.u32 %s142, %s143
      %p145 = scmp.eq.s32.totalorder %s144, 0
      %s147 = sadd.s32 %s146, 1
      %s148 = scalar_select %p145, %s146, %s147
      %p151 = pneg %p145
      %p152 = scmp.eq.s32.totalorder %s22, 7
      %p153 = por %p151, %p152
      %p154 = scmp.ne.s32.totalorder %s146, %s149
      %p155 = scmp.eq.s32.totalorder %s22, 0
      %p156 = por %p154, %p155
      %p157 = scmp.ne.s32.totalorder %s146, %s149
      %p158 = scmp.eq.s32.totalorder %s27, 7
      %p159 = por %p157, %p158
      %p160 = scmp.ne.s32.totalorder %s149, %s150
      %p161 = scmp.eq.s32.totalorder %s27, 0
      %p162 = por %p160, %p161
      %p163 = scmp.ne.s32.totalorder %s149, %s150
      %p164 = scmp.eq.s32.totalorder %s28, 7
      %p165 = por %p163, %p164
      %p167 = scmp.ne.s32.totalorder %s150, %s166
      %p168 = scmp.eq.s32.totalorder %s28, 0
      %p169 = por %p167, %p168
      %s170 = ssub.s32 %s29, %s41
      %p171 = scmp.eq.s32.totalorder %s170, 0
      %s173 = sadd.s32 %s172, 1
      %s174 = scalar_select %p171, %s172, %s173
      %p177 = pneg %p171
      %p178 = scmp.eq.s32.totalorder %s22, 7
      %p179 = por %p177, %p178
      %p180 = scmp.ne.s32.totalorder %s172, %s175
      %p181 = scmp.eq.s32.totalorder %s22, 0
      %p182 = por %p180, %p181
      %p183 = scmp.ne.s32.totalorder %s172, %s175
      %p184 = scmp.eq.s32.totalorder %s27, 7
      %p185 = por %p183, %p184
      %p186 = scmp.ne.s32.totalorder %s175, %s176
      %p187 = scmp.eq.s32.totalorder %s27, 0
      %p188 = por %p186, %p187
      %p189 = scmp.ne.s32.totalorder %s175, %s176
      %p190 = scmp.eq.s32.totalorder %s28, 7
      %p191 = por %p189, %p190
      %p193 = scmp.ne.s32.totalorder %s176, %s192
      %p194 = scmp.eq.s32.totalorder %s28, 0
      %p195 = por %p193, %p194
      %p196 = scmp.le.s32.totalorder 1, %s22
      %p197 = scmp.lt.s32.totalorder %s22, 9
      %p198 = pnand %p196, %p197
      %p199 = pneg %p198
      // Predicated region
      $region9: #{tpu_custom_call.1} parent=5 // pred_check
        _
      $region10: #{tpu_custom_call.1} parent=5 // pred_check_branch
        %201 = sbr.rel (%p198) target = $region12
      $region11: #{tpu_custom_call.1} parent=5 // pred_region
        %s202 = ssub.s32 %s22, 1
      $region12: #{tpu_custom_call.1} parent=5 // pred_fallthru
        _
      %p203 = scmp.lt.s32.totalorder %s22, 8
      // Predicated region
      $region13: #{tpu_custom_call.1} parent=5 // pred_check
        %p204 = pneg %p203
      $region14: #{tpu_custom_call.1} parent=5 // pred_check_branch
        %206 = sbr.rel (%p204) target = $region16
      $region15: #{tpu_custom_call.1} parent=5 // pred_region
        // Predicated region
        $region17: #{tpu_custom_call.1} parent=15 // pred_check
          %p207 = pneg %p56
        $region18: #{tpu_custom_call.1} parent=15 // pred_check_branch
          %209 = sbr.rel (%p207) target = $region20
        $region19: #{tpu_custom_call.1} parent=15 // pred_region
          #allocation13 [shape = 'u32[6]{0}', space=smem, size = 0x18, scoped, tag = 'DMA stride descriptor']
          %s210 = sand.u32 %s46, 1
          %s211 = scalar_lea.sflag [#allocation4], %s210
          %s212 = sand.u32 %s46, 1
          %s213 = smul.addr %s212, 96
          %s214 = scalar_lea.vmem [#allocation3], %s213
          %s215 = smul.u32 4, %s30
          %s217 = ssub.s32 1536, 1536
          %218 = vsyncadd %s211, %s217
          %s219 = smul.addr %s29, 48
          %s220 = sadd.s32 %s215, %s219
          %s221 = smul.addr %s220, 128
          %s222 = scalar_lea.hbm %s0, %s221
          %s224 = sshll.u32 1, 14
          %s225 = sxor.u32 4294967295, %s224
          %s227 = sld [smem:[#allocation0]]
          %s228 = sadd.s32 2, %s227
          %s230 = sshll.u32 7, 26
          %s231 = sxor.u32 4294967295, %s230
          %s232 = sand.u32 0, %s231
          %s233 = sshll.u32 %s228, 26
          %s234 = sor.u32 %s232, %s233
          %s235 = sshll.u32 %s214, 4
          %s236 = int_to_ptr.vmem [resolvable:$true] %s235
          %242 = sst [smem:[#allocation13]] 2048
          %s243 = scalar_lea.smem [#allocation13], 1
          %244 = sst [smem:[%s243]] 512
          %s245 = scalar_lea.smem [#allocation13], 2
          %246 = sst [smem:[%s245]] 4
          %s247 = scalar_lea.smem [#allocation13], 3
          %248 = sst [smem:[%s247]] 128
          %s249 = scalar_lea.smem [#allocation13], 4
          %250 = sst [smem:[%s249]] 128
          %s251 = scalar_lea.smem [#allocation13], 5
          %252 = sst [smem:[%s251]] 8
          %254 = dma.general %s222, 1536, %s236, %s211, [#allocation12], [#allocation13], %s234, 0
        $region20: #{tpu_custom_call.1} parent=15 // pred_fallthru
          _
        // Predicated region
        $region21: #{tpu_custom_call.1} parent=15 // pred_check
          %p255 = pneg %p84
        $region22: #{tpu_custom_call.1} parent=15 // pred_check_branch
          %257 = sbr.rel (%p255) target = $region24
        $region23: #{tpu_custom_call.1} parent=15 // pred_region
          #allocation15 [shape = 'u32[6]{0}', space=smem, size = 0x18, scoped, tag = 'DMA stride descriptor']
          %s258 = sand.u32 %s22, 1
          %s259 = scalar_lea.sflag [#allocation7], %s258
          %s260 = sand.u32 %s74, 1
          %s261 = smul.addr %s260, 96
          %s262 = scalar_lea.vmem [#allocation6], %s261
          %s263 = smul.u32 4, %s30
          %s265 = ssub.s32 1536, 1536
          %266 = vsyncadd %s259, %s265
          %s267 = smul.addr %s29, 48
          %s268 = sadd.s32 %s263, %s267
          %s269 = smul.addr %s268, 128
          %s270 = scalar_lea.hbm %s1, %s269
          %s272 = sshll.u32 1, 14
          %s273 = sxor.u32 4294967295, %s272
          %s275 = sld [smem:[#allocation0]]
          %s276 = sadd.s32 2, %s275
          %s278 = sshll.u32 7, 26
          %s279 = sxor.u32 4294967295, %s278
          %s280 = sand.u32 0, %s279
          %s281 = sshll.u32 %s276, 26
          %s282 = sor.u32 %s280, %s281
          %s283 = sshll.u32 %s262, 4
          %s284 = int_to_ptr.vmem [resolvable:$true] %s283
          %290 = sst [smem:[#allocation15]] 2048
          %s291 = scalar_lea.smem [#allocation15], 1
          %292 = sst [smem:[%s291]] 512
          %s293 = scalar_lea.smem [#allocation15], 2
          %294 = sst [smem:[%s293]] 4
          %s295 = scalar_lea.smem [#allocation15], 3
          %296 = sst [smem:[%s295]] 128
          %s297 = scalar_lea.smem [#allocation15], 4
          %298 = sst [smem:[%s297]] 128
          %s299 = scalar_lea.smem [#allocation15], 5
          %300 = sst [smem:[%s299]] 8
          %302 = dma.general %s270, 1536, %s284, %s259, [#allocation14], [#allocation15], %s282, 0
        $region24: #{tpu_custom_call.1} parent=15 // pred_fallthru
          _
        // Predicated region
        $region25: #{tpu_custom_call.1} parent=15 // pred_check
          %p303 = pneg %p120
        $region26: #{tpu_custom_call.1} parent=15 // pred_check_branch
          %305 = sbr.rel (%p303) target = $region28
        $region27: #{tpu_custom_call.1} parent=15 // pred_region
          %s306 = sand.u32 %s22, 1
          %s307 = scalar_lea.sflag [#allocation7], %s306
          %s308 = sand.u32 %s110, 1
          %s309 = smul.addr %s308, 24
          %s310 = scalar_lea.vmem [#allocation8], %s309
          %s311 = sadd.s32 %s30, 1
          %s312 = smul.u32 %s311, 4
          %p313 = scmp.lt.s32.totalorder %s312, 15
          %s314 = scalar_select %p313, %s312, 15
          %s316 = ssub.s32 384, 384
          %317 = vsyncadd %s307, %s316
          %s318 = smul.addr %s29, 48
          %s319 = sadd.s32 %s314, %s318
          %s320 = smul.addr %s319, 128
          %s321 = scalar_lea.hbm %s2, %s320
          %s322 = sshll.u32 %s310, 4
          %s323 = int_to_ptr.vmem [resolvable:$true] %s322
          %328 = dma.hbm_to_vmem [thread:$0]  %s321, 384, %s323, %s307, 2048, 128, 8
        $region28: #{tpu_custom_call.1} parent=15 // pred_fallthru
          _
        // Predicated region
        $region29: #{tpu_custom_call.1} parent=15 // pred_check
          %p329 = pneg %p156
        $region30: #{tpu_custom_call.1} parent=15 // pred_check_branch
          %331 = sbr.rel (%p329) target = $region32
        $region31: #{tpu_custom_call.1} parent=15 // pred_region
          %s332 = sand.u32 %s146, 1
          %s333 = scalar_lea.sflag [#allocation10], %s332
          %s334 = sand.u32 %s146, 1
          %s335 = smul.addr %s334, 24
          %s336 = scalar_lea.vmem [#allocation9], %s335
          %s337 = sadd.s32 %s30, 1
          %s338 = smul.u32 %s337, 4
          %p339 = scmp.lt.s32.totalorder %s338, 15
          %s340 = scalar_select %p339, %s338, 15
          %s342 = ssub.s32 384, 384
          %343 = vsyncadd %s333, %s342
          %s344 = smul.addr %s29, 48
          %s345 = sadd.s32 %s340, %s344
          %s346 = smul.addr %s345, 128
          %s347 = scalar_lea.hbm %s3, %s346
          %s348 = sshll.u32 %s336, 4
          %s349 = int_to_ptr.vmem [resolvable:$true] %s348
          %354 = dma.hbm_to_vmem [thread:$0]  %s347, 384, %s349, %s333, 2048, 128, 8
        $region32: #{tpu_custom_call.1} parent=15 // pred_fallthru
          _
      $region16: #{tpu_custom_call.1} parent=5 // pred_fallthru
        _
      %p355 = scmp.le.s32.totalorder 1, %s22
      %p356 = scmp.lt.s32.totalorder %s22, 9
      %p357 = pnand %p355, %p356
      %p358 = pneg %p357
      // Predicated region
      $region33: #{tpu_custom_call.1} parent=5 // pred_check
        _
      $region34: #{tpu_custom_call.1} parent=5 // pred_check_branch
        %360 = sbr.rel (%p357) target = $region36
      $region35: #{tpu_custom_call.1} parent=5 // pred_region
        %s361 = ssub.s32 %s22, 1
        %s362 = sand.u32 %s49, 1
        %s363 = scalar_lea.sflag [#allocation4], %s362
        %s364 = sand.u32 %s49, 1
        %s365 = smul.addr %s364, 96
        %s366 = scalar_lea.vmem [#allocation3], %s365
        // Predicated region
        $region37: #{tpu_custom_call.1} parent=35 // pred_check
          %p367 = pneg %p62
        $region38: #{tpu_custom_call.1} parent=35 // pred_check_branch
          %369 = sbr.rel (%p367) target = $region40
        $region39: #{tpu_custom_call.1} parent=35 // pred_region
          %370 = dma.done %s363, 1536
        $region40: #{tpu_custom_call.1} parent=35 // pred_fallthru
          _
        %s371 = sand.u32 %s27, 1
        %s372 = scalar_lea.sflag [#allocation7], %s371
        %s373 = sand.u32 %s77, 1
        %s374 = smul.addr %s373, 96
        %s375 = scalar_lea.vmem [#allocation6], %s374
        // Predicated region
        $region41: #{tpu_custom_call.1} parent=35 // pred_check
          %p376 = pneg %p90
        $region42: #{tpu_custom_call.1} parent=35 // pred_check_branch
          %378 = sbr.rel (%p376) target = $region44
        $region43: #{tpu_custom_call.1} parent=35 // pred_region
          %379 = dma.done %s372, 1536
        $region44: #{tpu_custom_call.1} parent=35 // pred_fallthru
          _
        %s380 = sand.u32 %s27, 1
        %s381 = scalar_lea.sflag [#allocation7], %s380
        %s382 = sand.u32 %s113, 1
        %s383 = smul.addr %s382, 24
        %s384 = scalar_lea.vmem [#allocation8], %s383
        // Predicated region
        $region45: #{tpu_custom_call.1} parent=35 // pred_check
          %p385 = pneg %p126
        $region46: #{tpu_custom_call.1} parent=35 // pred_check_branch
          %387 = sbr.rel (%p385) target = $region48
        $region47: #{tpu_custom_call.1} parent=35 // pred_region
          %388 = dma.done %s381, 384
        $region48: #{tpu_custom_call.1} parent=35 // pred_fallthru
          _
        %s389 = sand.u32 %s149, 1
        %s390 = scalar_lea.sflag [#allocation10], %s389
        %s391 = sand.u32 %s149, 1
        %s392 = smul.addr %s391, 24
        %s393 = scalar_lea.vmem [#allocation9], %s392
        // Predicated region
        $region49: #{tpu_custom_call.1} parent=35 // pred_check
          %p394 = pneg %p162
        $region50: #{tpu_custom_call.1} parent=35 // pred_check_branch
          %396 = sbr.rel (%p394) target = $region52
        $region51: #{tpu_custom_call.1} parent=35 // pred_region
          %397 = dma.done %s390, 384
        $region52: #{tpu_custom_call.1} parent=35 // pred_fallthru
          _
        %s398 = sand.u32 %s49, 1
        %s399 = scalar_lea.sflag [#allocation4], %s398
        %s400 = sand.u32 %s49, 1
        %s401 = smul.addr %s400, 96
        %s402 = scalar_lea.vmem [#allocation3], %s401
        %p403 = pneg %p62
        %p404 = pneg %p59
        %s405 = sand.u32 %s27, 1
        %s406 = scalar_lea.sflag [#allocation7], %s405
        %s407 = sand.u32 %s77, 1
        %s408 = smul.addr %s407, 96
        %s409 = scalar_lea.vmem [#allocation6], %s408
        %p410 = pneg %p90
        %p411 = pneg %p87
        %s412 = sand.u32 %s27, 1
        %s413 = scalar_lea.sflag [#allocation7], %s412
        %s414 = sand.u32 %s113, 1
        %s415 = smul.addr %s414, 24
        %s416 = scalar_lea.vmem [#allocation8], %s415
        %p417 = pneg %p126
        %p418 = pneg %p123
        %s419 = sand.u32 %s149, 1
        %s420 = scalar_lea.sflag [#allocation10], %s419
        %s421 = sand.u32 %s149, 1
        %s422 = smul.addr %s421, 24
        %s423 = scalar_lea.vmem [#allocation9], %s422
        %p424 = pneg %p162
        %p425 = pneg %p159
        %p426 = pneg %p188
        %p427 = pneg %p185
        %s428 = sand.u32 %s175, 1
        %s429 = scalar_lea.sflag [#allocation5], %s428
        %s430 = sand.u32 %s175, 1
        %s431 = smul.addr %s430, 16
        %s432 = scalar_lea.vmem [#allocation11], %s431
        %s433 = smul.u32 4, %s32
        %s434 = smul.u32 4, %s32
        %s435 = sadd.s32 %s32, 1
        %s436 = smul.u32 %s435, 4
        %p437 = scmp.lt.s32.totalorder %s436, 15
        %s438 = scalar_select %p437, %s436, 15
        %s439 = sadd.s32 %s32, 1
        %s440 = smul.u32 %s439, 4
        %p441 = scmp.lt.s32.totalorder %s440, 15
        %s442 = scalar_select %p441, %s440, 15
        %p443 = scmp.eq.s32.totalorder %s32, 0
        %p444 = scmp.eq.s32.totalorder %s32, 3
        %v445 = vld [vmem:[%s366] sm:$0xff]
        %v446 = vld [vmem:[%s366 + $0x8] sm:$0xff]
        %v447 = vld [vmem:[%s366 + $0x10] sm:$0xff]
        %v448 = vld [vmem:[%s366 + $0x18] sm:$0xff]
        %v449 = vld [vmem:[%s366 + $0x20] sm:$0xff]
        %v450 = vld [vmem:[%s366 + $0x28] sm:$0xff]
        %v451 = vld [vmem:[%s366 + $0x30] sm:$0xff]
        %v452 = vld [vmem:[%s366 + $0x38] sm:$0xff]
        %v453 = vld [vmem:[%s366 + $0x40] sm:$0xff]
        %v454 = vld [vmem:[%s366 + $0x48] sm:$0xff]
        %v455 = vld [vmem:[%s366 + $0x50] sm:$0xff]
        %v456 = vld [vmem:[%s366 + $0x58] sm:$0xff]
        %v457 = vld [vmem:[%s375] sm:$0xff]
        %v458 = vld [vmem:[%s375 + $0x8] sm:$0xff]
        %v459 = vld [vmem:[%s375 + $0x10] sm:$0xff]
        %v460 = vld [vmem:[%s375 + $0x18] sm:$0xff]
        %v461 = vld [vmem:[%s375 + $0x20] sm:$0xff]
        %v462 = vld [vmem:[%s375 + $0x28] sm:$0xff]
        %v463 = vld [vmem:[%s375 + $0x30] sm:$0xff]
        %v464 = vld [vmem:[%s375 + $0x38] sm:$0xff]
        %v465 = vld [vmem:[%s375 + $0x40] sm:$0xff]
        %v466 = vld [vmem:[%s375 + $0x48] sm:$0xff]
        %v467 = vld [vmem:[%s375 + $0x50] sm:$0xff]
        %v468 = vld [vmem:[%s375 + $0x58] sm:$0xff]
        %v469 = vsub.f32 %v445, %v457
        %v470 = vsub.f32 %v446, %v458
        %v471 = vsub.f32 %v447, %v459
        %v472 = vsub.f32 %v448, %v460
        %v473 = vsub.f32 %v449, %v461
        %v474 = vsub.f32 %v450, %v462
        %v475 = vsub.f32 %v451, %v463
        %v476 = vsub.f32 %v452, %v464
        %v477 = vsub.f32 %v453, %v465
        %v478 = vsub.f32 %v454, %v466
        %v479 = vsub.f32 %v455, %v467
        %v480 = vsub.f32 %v456, %v468
        %v481 = vand.u32 2147483647, %v469
        %v482 = vand.u32 2147483647, %v470
        %v483 = vand.u32 2147483647, %v471
        %v484 = vand.u32 2147483647, %v472
        %v485 = vand.u32 2147483647, %v473
        %v486 = vand.u32 2147483647, %v474
        %v487 = vand.u32 2147483647, %v475
        %v488 = vand.u32 2147483647, %v476
        %v489 = vand.u32 2147483647, %v477
        %v490 = vand.u32 2147483647, %v478
        %v491 = vand.u32 2147483647, %v479
        %v492 = vand.u32 2147483647, %v480
        %v493 = vadd.f32 %v481, %v485
        %v494 = vadd.f32 %v493, %v489
        %v495 = vadd.f32 %v482, %v486
        %v496 = vadd.f32 %v495, %v490
        %v497 = vadd.f32 %v483, %v487
        %v498 = vadd.f32 %v497, %v491
        %v499 = vadd.f32 %v484, %v488
        %v500 = vadd.f32 %v499, %v492
        %v501 = vmul.f32 %v445, 0.25678906
        %v502 = vmul.f32 %v446, 0.25678906
        %v503 = vmul.f32 %v447, 0.25678906
        %v504 = vmul.f32 %v448, 0.25678906
        %v505 = vmul.f32 %v449, 0.50412893
        %v506 = vmul.f32 %v450, 0.50412893
        %v507 = vmul.f32 %v451, 0.50412893
        %v508 = vmul.f32 %v452, 0.50412893
        %v509 = vadd.f32 %v501, %v505
        %v510 = vadd.f32 %v502, %v506
        %v511 = vadd.f32 %v503, %v507
        %v512 = vadd.f32 %v504, %v508
        %v513 = vmul.f32 %v453, 0.09790625
        %v514 = vmul.f32 %v454, 0.09790625
        %v515 = vmul.f32 %v455, 0.09790625
        %v516 = vmul.f32 %v456, 0.09790625
        %v517 = vadd.f32 %v509, %v513
        %v518 = vadd.f32 %v510, %v514
        %v519 = vadd.f32 %v511, %v515
        %v520 = vadd.f32 %v512, %v516
        %v521 = vmul.f32 %v457, 0.25678906
        %v522 = vmul.f32 %v458, 0.25678906
        %v523 = vmul.f32 %v459, 0.25678906
        %v524 = vmul.f32 %v460, 0.25678906
        %v525 = vmul.f32 %v461, 0.50412893
        %v526 = vmul.f32 %v462, 0.50412893
        %v527 = vmul.f32 %v463, 0.50412893
        %v528 = vmul.f32 %v464, 0.50412893
        %v529 = vadd.f32 %v521, %v525
        %v530 = vadd.f32 %v522, %v526
        %v531 = vadd.f32 %v523, %v527
        %v532 = vadd.f32 %v524, %v528
        %v533 = vmul.f32 %v465, 0.09790625
        %v534 = vmul.f32 %v466, 0.09790625
        %v535 = vmul.f32 %v467, 0.09790625
        %v536 = vmul.f32 %v468, 0.09790625
        %v537 = vadd.f32 %v529, %v533
        %v538 = vadd.f32 %v530, %v534
        %v539 = vadd.f32 %v531, %v535
        %v540 = vadd.f32 %v532, %v536
        %v541 = vld [vmem:[#allocation2] sm:$0x1]
        %s542 = scalar_select %p443, 1, 0
        %v543 = vstv %s542
        %vm544 = vcmp.eq.s32.totalorder %v543, 1
        %v545 = vsel %vm544, 0.0, %v541
        %s546 = scalar_lea.vmem [#allocation2], 1
        %v547 = vld [vmem:[%s546] sm:$0x1]
        %v548 = vsel %vm544, 0.0, %v547
        %v549 = vld [vmem:[%s384] sm:$0x1]
        %v550 = vld [vmem:[%s384 + $0x8] sm:$0x1]
        %v551 = vld [vmem:[%s384 + $0x10] sm:$0x1]
        %v552 = vmul.f32 %v549, 0.25678906
        %v553 = vmul.f32 %v550, 0.50412893
        %v554 = vadd.f32 %v552, %v553
        %v555 = vmul.f32 %v551, 0.09790625
        %v556 = vadd.f32 %v554, %v555
        %s557 = scalar_select %p444, 1, 0
        %v558 = vstv %s557
        %vm559 = vcmp.eq.s32.totalorder %v558, 1
        %v560 = vsel %vm559, 0.0, %v556
        %v561 = vld [vmem:[%s393] sm:$0x1]
        %v562 = vld [vmem:[%s393 + $0x8] sm:$0x1]
        %v563 = vld [vmem:[%s393 + $0x10] sm:$0x1]
        %v564 = vmul.f32 %v561, 0.25678906
        %v565 = vmul.f32 %v562, 0.50412893
        %v566 = vadd.f32 %v564, %v565
        %v567 = vmul.f32 %v563, 0.09790625
        %v568 = vadd.f32 %v566, %v567
        %v569 = vsel %vm559, 0.0, %v568
        %v570 = vlaneseq
        %v571 = vshrl.u32 %v570, 7
        %v572 = vadd.s32 %v571, 8
        %v573 = vadd.s32 %v571, 16
        %v574 = vadd.s32 %v571, 24
        %v575 = vlaneseq
        %v576 = vand.u32 %v575, 127
        %vm577 = vcmp.eq.s32.totalorder %v571, 0
        %vm578 = vcmp.eq.s32.totalorder %v572, 0
        %vm579 = vcmp.eq.s32.totalorder %v573, 0
        %vm580 = vcmp.eq.s32.totalorder %v574, 0
        %vm581 = vcmp.eq.s32.totalorder %v571, 31
        %vm582 = vcmp.eq.s32.totalorder %v572, 31
        %vm583 = vcmp.eq.s32.totalorder %v573, 31
        %vm584 = vcmp.eq.s32.totalorder %v574, 31
        %vm585 = vcmp.eq.s32.totalorder %v576, 0
        %vm586 = vcmp.eq.s32.totalorder %v576, 127
        %v587 = vrot.slane %v517, 7
        %v588 = vrot.slane %v518, 7
        %v589 = vrot.slane %v519, 7
        %v590 = vrot.slane %v520, 7
        %vm591 = vcmp.lt.s32.totalorder %v571, 1
        %v592 = vsel %vm591, %v589, %v590
        %v593 = vsel %vm591, %v588, %v589
        %v594 = vsel %vm591, %v587, %v588
        %v595 = vsel %vm591, %v590, %v587
        %v597 = vlaneseq
        %v598 = vshrl.u32 %v597, 7
        %v599 = vsub.s32 0, %v598
        %v600 = vrot.slane %v545, %v599
        %v602 = vsel %vm577, %v600, %v595
        %v603 = vsel %vm578, %v600, %v594
        %v604 = vsel %vm579, %v600, %v593
        %v605 = vsel %vm580, %v600, %v592
        %v606 = vrot.slane %v517, 1
        %v607 = vrot.slane %v518, 1
        %v608 = vrot.slane %v519, 1
        %v609 = vrot.slane %v520, 1
        %vm610 = vcmp.lt.s32.totalorder %v571, 7
        %v611 = vsel %vm610, %v608, %v609
        %v612 = vsel %vm610, %v607, %v608
        %v613 = vsel %vm610, %v606, %v607
        %v614 = vsel %vm610, %v609, %v606
        %v615 = vlaneseq
        %v616 = vshrl.u32 %v615, 7
        %v617 = vsub.s32 0, %v616
        %v618 = vrot.slane %v560, %v617
        %v619 = vsel %vm581, %v618, %v613
        %v620 = vsel %vm582, %v618, %v612
        %v621 = vsel %vm583, %v618, %v611
        %v622 = vsel %vm584, %v618, %v614
        %623 = vrot.lane.b32.xlu0 %v517, 1
        %v624 = vpop.permute.xlu0 %623
        %625 = vrot.lane.b32.xlu0 %v518, 1
        %v626 = vpop.permute.xlu0 %625
        %627 = vrot.lane.b32.xlu0 %v519, 1
        %v628 = vpop.permute.xlu0 %627
        %629 = vrot.lane.b32.xlu0 %v520, 1
        %v630 = vpop.permute.xlu0 %629
        %v631 = vsel %vm585, 0.0, %v624
        %v632 = vsel %vm585, 0.0, %v626
        %v633 = vsel %vm585, 0.0, %v628
        %v634 = vsel %vm585, 0.0, %v630
        %635 = vrot.lane.b32.xlu0 %v517, 127
        %v636 = vpop.permute.xlu0 %635
        %637 = vrot.lane.b32.xlu0 %v518, 127
        %v638 = vpop.permute.xlu0 %637
        %639 = vrot.lane.b32.xlu0 %v519, 127
        %v640 = vpop.permute.xlu0 %639
        %641 = vrot.lane.b32.xlu0 %v520, 127
        %v642 = vpop.permute.xlu0 %641
        %v643 = vsel %vm586, 0.0, %v636
        %v644 = vsel %vm586, 0.0, %v638
        %v645 = vsel %vm586, 0.0, %v640
        %v646 = vsel %vm586, 0.0, %v642
        %v647 = vsub.f32 %v619, %v602
        %v648 = vsub.f32 %v620, %v603
        %v649 = vsub.f32 %v621, %v604
        %v650 = vsub.f32 %v622, %v605
        %v651 = vsub.f32 %v643, %v631
        %v652 = vsub.f32 %v644, %v632
        %v653 = vsub.f32 %v645, %v633
        %v654 = vsub.f32 %v646, %v634
        %v655 = vmul.f32 %v647, %v647
        %v656 = vmul.f32 %v648, %v648
        %v657 = vmul.f32 %v649, %v649
        %v658 = vmul.f32 %v650, %v650
        %v659 = vmul.f32 %v651, %v651
        %v660 = vmul.f32 %v652, %v652
        %v661 = vmul.f32 %v653, %v653
        %v662 = vmul.f32 %v654, %v654
        %v663 = vadd.f32 %v655, %v659
        %v664 = vadd.f32 %v656, %v660
        %v665 = vadd.f32 %v657, %v661
        %v666 = vadd.f32 %v658, %v662
        %v667 = vadd.f32 %v663, 1e-06
        %v668 = vadd.f32 %v664, 1e-06
        %v669 = vadd.f32 %v665, 1e-06
        %v670 = vadd.f32 %v666, 1e-06
        %v671 = vrsqrt.pop %v667
        %v672 = vmul.f32 %v667, %v671
        %vm673 = vcmp.eq.f32.partialorder %v667, inf
        %v674 = vsel %vm673, %v667, %v672
        %vm675 = vcmp.eq.f32.partialorder %v667, 0.0
        %v676 = vand.u32 %v667, 2147483648
        %v677 = vsel %vm675, %v676, %v674
        %v678 = vrsqrt.pop %v668
        %v679 = vmul.f32 %v668, %v678
        %vm680 = vcmp.eq.f32.partialorder %v668, inf
        %v681 = vsel %vm680, %v668, %v679
        %vm682 = vcmp.eq.f32.partialorder %v668, 0.0
        %v683 = vand.u32 %v668, 2147483648
        %v684 = vsel %vm682, %v683, %v681
        %v685 = vrsqrt.pop %v669
        %v686 = vmul.f32 %v669, %v685
        %vm687 = vcmp.eq.f32.partialorder %v669, inf
        %v688 = vsel %vm687, %v669, %v686
        %vm689 = vcmp.eq.f32.partialorder %v669, 0.0
        %v690 = vand.u32 %v669, 2147483648
        %v691 = vsel %vm689, %v690, %v688
        %v692 = vrsqrt.pop %v670
        %v693 = vmul.f32 %v670, %v692
        %vm694 = vcmp.eq.f32.partialorder %v670, inf
        %v695 = vsel %vm694, %v670, %v693
        %vm696 = vcmp.eq.f32.partialorder %v670, 0.0
        %v697 = vand.u32 %v670, 2147483648
        %v698 = vsel %vm696, %v697, %v695
        %v699 = vrot.slane %v537, 7
        %v700 = vrot.slane %v538, 7
        %v701 = vrot.slane %v539, 7
        %v702 = vrot.slane %v540, 7
        %v703 = vsel %vm591, %v701, %v702
        %v704 = vsel %vm591, %v700, %v701
        %v705 = vsel %vm591, %v699, %v700
        %v706 = vsel %vm591, %v702, %v699
        %v708 = vlaneseq
        %v709 = vshrl.u32 %v708, 7
        %v710 = vsub.s32 0, %v709
        %v711 = vrot.slane %v548, %v710
        %v713 = vsel %vm577, %v711, %v706
        %v714 = vsel %vm578, %v711, %v705
        %v715 = vsel %vm579, %v711, %v704
        %v716 = vsel %vm580, %v711, %v703
        %v717 = vrot.slane %v537, 1
        %v718 = vrot.slane %v538, 1
        %v719 = vrot.slane %v539, 1
        %v720 = vrot.slane %v540, 1
        %v721 = vsel %vm610, %v719, %v720
        %v722 = vsel %vm610, %v718, %v719
        %v723 = vsel %vm610, %v717, %v718
        %v724 = vsel %vm610, %v720, %v717
        %v725 = vlaneseq
        %v726 = vshrl.u32 %v725, 7
        %v727 = vsub.s32 0, %v726
        %v728 = vrot.slane %v569, %v727
        %v729 = vsel %vm581, %v728, %v723
        %v730 = vsel %vm582, %v728, %v722
        %v731 = vsel %vm583, %v728, %v721
        %v732 = vsel %vm584, %v728, %v724
        %733 = vrot.lane.b32.xlu0 %v537, 1
        %v734 = vpop.permute.xlu0 %733
        %735 = vrot.lane.b32.xlu0 %v538, 1
        %v736 = vpop.permute.xlu0 %735
        %737 = vrot.lane.b32.xlu0 %v539, 1
        %v738 = vpop.permute.xlu0 %737
        %739 = vrot.lane.b32.xlu0 %v540, 1
        %v740 = vpop.permute.xlu0 %739
        %v741 = vsel %vm585, 0.0, %v734
        %v742 = vsel %vm585, 0.0, %v736
        %v743 = vsel %vm585, 0.0, %v738
        %v744 = vsel %vm585, 0.0, %v740
        %745 = vrot.lane.b32.xlu0 %v537, 127
        %v746 = vpop.permute.xlu0 %745
        %747 = vrot.lane.b32.xlu0 %v538, 127
        %v748 = vpop.permute.xlu0 %747
        %749 = vrot.lane.b32.xlu0 %v539, 127
        %v750 = vpop.permute.xlu0 %749
        %751 = vrot.lane.b32.xlu0 %v540, 127
        %v752 = vpop.permute.xlu0 %751
        %v753 = vsel %vm586, 0.0, %v746
        %v754 = vsel %vm586, 0.0, %v748
        %v755 = vsel %vm586, 0.0, %v750
        %v756 = vsel %vm586, 0.0, %v752
        %v757 = vsub.f32 %v729, %v713
        %v758 = vsub.f32 %v730, %v714
        %v759 = vsub.f32 %v731, %v715
        %v760 = vsub.f32 %v732, %v716
        %v761 = vsub.f32 %v753, %v741
        %v762 = vsub.f32 %v754, %v742
        %v763 = vsub.f32 %v755, %v743
        %v764 = vsub.f32 %v756, %v744
        %v765 = vmul.f32 %v757, %v757
        %v766 = vmul.f32 %v758, %v758
        %v767 = vmul.f32 %v759, %v759
        %v768 = vmul.f32 %v760, %v760
        %v769 = vmul.f32 %v761, %v761
        %v770 = vmul.f32 %v762, %v762
        %v771 = vmul.f32 %v763, %v763
        %v772 = vmul.f32 %v764, %v764
        %v773 = vadd.f32 %v765, %v769
        %v774 = vadd.f32 %v766, %v770
        %v775 = vadd.f32 %v767, %v771
        %v776 = vadd.f32 %v768, %v772
        %v777 = vadd.f32 %v773, 1e-06
        %v778 = vadd.f32 %v774, 1e-06
        %v779 = vadd.f32 %v775, 1e-06
        %v780 = vadd.f32 %v776, 1e-06
        %v781 = vrsqrt.pop %v777
        %v782 = vmul.f32 %v777, %v781
        %vm783 = vcmp.eq.f32.partialorder %v777, inf
        %v784 = vsel %vm783, %v777, %v782
        %vm785 = vcmp.eq.f32.partialorder %v777, 0.0
        %v786 = vand.u32 %v777, 2147483648
        %v787 = vsel %vm785, %v786, %v784
        %v788 = vrsqrt.pop %v778
        %v789 = vmul.f32 %v778, %v788
        %vm790 = vcmp.eq.f32.partialorder %v778, inf
        %v791 = vsel %vm790, %v778, %v789
        %vm792 = vcmp.eq.f32.partialorder %v778, 0.0
        %v793 = vand.u32 %v778, 2147483648
        %v794 = vsel %vm792, %v793, %v791
        %v795 = vrsqrt.pop %v779
        %v796 = vmul.f32 %v779, %v795
        %vm797 = vcmp.eq.f32.partialorder %v779, inf
        %v798 = vsel %vm797, %v779, %v796
        %vm799 = vcmp.eq.f32.partialorder %v779, 0.0
        %v800 = vand.u32 %v779, 2147483648
        %v801 = vsel %vm799, %v800, %v798
        %v802 = vrsqrt.pop %v780
        %v803 = vmul.f32 %v780, %v802
        %vm804 = vcmp.eq.f32.partialorder %v780, inf
        %v805 = vsel %vm804, %v780, %v803
        %vm806 = vcmp.eq.f32.partialorder %v780, 0.0
        %v807 = vand.u32 %v780, 2147483648
        %v808 = vsel %vm806, %v807, %v805
        %v809 = vsub.f32 %v787, %v677
        %v810 = vsub.f32 %v794, %v684
        %v811 = vsub.f32 %v801, %v691
        %v812 = vsub.f32 %v808, %v698
        %v813 = vand.u32 2147483647, %v809
        %v814 = vand.u32 2147483647, %v810
        %v815 = vand.u32 2147483647, %v811
        %v816 = vand.u32 2147483647, %v812
        %817 = vst [vmem:[#allocation2 - $0x7] sm:$0x80] %v520
        %818 = vst [vmem:[%s546 - $0x7] sm:$0x80] %v540
        %v819 = vadd.f32 %v494, %v496
        %v820 = vadd.f32 %v819, %v498
        %v821 = vadd.f32 %v820, %v500
        %v822 = vadd.f32 %v813, %v814
        %v823 = vadd.f32 %v822, %v815
        %v824 = vadd.f32 %v823, %v816
        // Predicated region
        $region53: #{tpu_custom_call.1} parent=35 // pred_check
          %p825 = pneg %p443
        $region54: #{tpu_custom_call.1} parent=35 // pred_check_branch
          %827 = sbr.rel (%p825) target = $region56
        $region55: #{tpu_custom_call.1} parent=35 // pred_region
          %828 = vst [vmem:[%s432] sm:$0xff] %v821
          %829 = vst [vmem:[%s432 + $0x8] sm:$0xff] %v824
        $region56: #{tpu_custom_call.1} parent=35 // pred_fallthru
          _
        %p830 = scmp.gt.s32.totalorder %s32, 0
        // Predicated region
        $region57: #{tpu_custom_call.1} parent=35 // pred_check
          %p831 = pneg %p830
        $region58: #{tpu_custom_call.1} parent=35 // pred_check_branch
          %833 = sbr.rel (%p831) target = $region60
        $region59: #{tpu_custom_call.1} parent=35 // pred_region
          %v834 = vld [vmem:[%s432] sm:$0xff]
          %v835 = vadd.f32 %v834, %v821
          %836 = vst [vmem:[%s432] sm:$0xff] %v835
          %v837 = vld [vmem:[%s432 + $0x8] sm:$0xff]
          %v838 = vadd.f32 %v837, %v824
          %839 = vst [vmem:[%s432 + $0x8] sm:$0xff] %v838
        $region60: #{tpu_custom_call.1} parent=35 // pred_fallthru
          _
        %s840 = sand.u32 %s175, 1
        %s841 = scalar_lea.sflag [#allocation5], %s840
        %s842 = sand.u32 %s175, 1
        %s843 = smul.addr %s842, 16
        %s844 = scalar_lea.vmem [#allocation11], %s843
        // Predicated region
        $region61: #{tpu_custom_call.1} parent=35 // pred_check
          %p845 = pneg %p185
        $region62: #{tpu_custom_call.1} parent=35 // pred_check_branch
          %847 = sbr.rel (%p845) target = $region64
        $region63: #{tpu_custom_call.1} parent=35 // pred_region
          %s849 = ssub.s32 256, 256
          %850 = vsyncadd %s841, %s849
          %s851 = smul.addr %s31, 2
          %s852 = smul.addr %s851, 128
          %s853 = scalar_lea.hbm %s4, %s852
          %s854 = sshll.u32 %s844, 4
          %s855 = int_to_ptr.vmem [resolvable:$true] %s854
          %860 = dma.vmem_to_hbm [thread:$0]  %s855, 256, %s853, %s841, 128, 128, 8
        $region64: #{tpu_custom_call.1} parent=35 // pred_fallthru
          _
      $region36: #{tpu_custom_call.1} parent=5 // pred_fallthru
        _
      %p861 = scmp.le.s32.totalorder 2, %s22
      // Predicated region
      $region65: #{tpu_custom_call.1} parent=5 // pred_check
        %p862 = pneg %p861
      $region66: #{tpu_custom_call.1} parent=5 // pred_check_branch
        %864 = sbr.rel (%p862) target = $region68
      $region67: #{tpu_custom_call.1} parent=5 // pred_region
        %s865 = ssub.s32 %s22, 2
        // Predicated region
        $region69: #{tpu_custom_call.1} parent=67 // pred_check
          %p866 = pneg %p191
        $region70: #{tpu_custom_call.1} parent=67 // pred_check_branch
          %868 = sbr.rel (%p866) target = $region72
        $region71: #{tpu_custom_call.1} parent=67 // pred_region
          %s869 = sand.u32 %s176, 1
          %s870 = scalar_lea.sflag [#allocation5], %s869
          %s871 = sand.u32 %s176, 1
          %s872 = smul.addr %s871, 16
          %s873 = scalar_lea.vmem [#allocation11], %s872
          %874 = dma.done %s870, 256
        $region72: #{tpu_custom_call.1} parent=67 // pred_fallthru
          _
      $region68: #{tpu_custom_call.1} parent=5 // pred_fallthru
        _
    $region6: #{tpu_custom_call.1} parent=1 // loop_footer
      %s26 = sadd.s32 1, %s22
    $region7: #{tpu_custom_call.1} parent=1 // loop_footer_branch
      %21 = sbr.rel target = $region3
    $region8: #{tpu_custom_call.1} parent=1 // loop_exit
      _
    %875 = vsyncpa [#allocation4], 1
    %s876 = scalar_lea.sflag [#allocation4], 1
    %877 = vsyncpa %s876, 1
    %878 = vsyncpa [#allocation7], 1
    %s879 = scalar_lea.sflag [#allocation7], 1
    %880 = vsyncpa %s879, 1
    %881 = vsyncpa [#allocation10], 1
    %s882 = scalar_lea.sflag [#allocation10], 1
    %883 = vsyncpa %s882, 1
    %884 = vsyncpa [#allocation5], 1
    %s885 = scalar_lea.sflag [#allocation5], 1
    %886 = vsyncpa %s885, 1

</llo_original>
